<compile_context>
chip_gen: v6e
topology: v6e:2x2x1
jax: 0.10.0
libtpu: 0.0.40
codegen_flags: <defaults>
</compile_context>

<pallas_src>
import jax
import jax.numpy as jnp
from jax.experimental import pallas as pl
from jax.experimental.pallas import tpu as pltpu

_LANE = 128
_SUBLANE = 8


def gcn_kernel(adj_ref, x_ref, wt_ref, b_ref, o_ref, xw_ref):
    """One grid step = one (batch, row-tile) pair.

    adj_ref : (1, TM, N_pad)        VMEM  -- row tile of adj[b]
    x_ref   : (1, N_pad, F_in)      VMEM  -- x[b], resident across row tiles
    wt_ref  : (F_in, F_out_pad)     VMEM  -- pre-transposed, lane-padded weight
    b_ref   : (1, F_out_pad)        VMEM  -- lane-padded bias
    o_ref   : (1, TM, F_out_pad)    VMEM  -- output row tile (lane-dense)
    xw_ref  : (N_pad, F_out_pad)    VMEM scratch (f32), reused across row tiles
    """
    # Compute xw = x[b] @ W^T once per batch (first row tile of this batch).
    @pl.when(pl.program_id(1) == 0)
    def _():
        xw_ref[...] = jnp.dot(
            x_ref[0], wt_ref[...], preferred_element_type=jnp.float32
        )

    # h = adj_tile @ xw + b   (MXU + VPU add), lane-dense store.
    h = jnp.dot(adj_ref[0], xw_ref[...], preferred_element_type=jnp.float32)
    o_ref[0] = (h + b_ref[...]).astype(o_ref.dtype)


def _round_up(v, m):
    return ((v + m - 1) // m) * m


def gcn_forward(x, adj, weight, bias, *, tm_target=256):
    """x: [B, N, F_in], adj: [B, N, N], weight: [F_out, F_in], bias: [F_out]."""
    B, N, F_in = x.shape
    F_out = weight.shape[0]
    itemsize = jnp.dtype(x.dtype).itemsize

    # Lane-dense output: pad F_out up to a multiple of 128.
    F_out_p = _round_up(F_out, _LANE)

    # Row tiling of adj: TM rows per step; pad N so TM divides it.
    if N <= tm_target:
        TM = _round_up(N, _SUBLANE)
        N_p = TM
    else:
        TM = tm_target
        N_p = _round_up(N, TM)
    M_tiles = N_p // TM

    # Zero padding is a mathematical no-op for the valid region.
    x_p = x if N_p == N else jnp.pad(x, ((0, 0), (0, N_p - N), (0, 0)))
    adj_p = adj if N_p == N else jnp.pad(
        adj, ((0, 0), (0, N_p - N), (0, N_p - N))
    )
    # Pre-transposed, lane-padded weight [F_in, F_out_p]; padded bias [1, F_out_p].
    w_t = jnp.zeros((F_in, F_out_p), weight.dtype).at[:, :F_out].set(weight.T)
    b_p = jnp.zeros((1, F_out_p), bias.dtype).at[0, :F_out].set(bias)

    flops = 2 * B * N_p * F_in * F_out_p + 2 * B * N_p * N_p * F_out_p
    bytes_accessed = (
        adj_p.size + x_p.size + w_t.size + b_p.size + B * N_p * F_out_p
    ) * itemsize

    out_p = pl.pallas_call(
        gcn_kernel,
        out_shape=jax.ShapeDtypeStruct((B, N_p, F_out_p), x.dtype),
        grid_spec=pltpu.PrefetchScalarGridSpec(
            num_scalar_prefetch=0,
            grid=(B, M_tiles),
            in_specs=[
                pl.BlockSpec((1, TM, N_p), lambda b, m: (b, m, 0)),     # adj row tile
                pl.BlockSpec((1, N_p, F_in), lambda b, m: (b, 0, 0)),   # x[b] (resident)
                pl.BlockSpec((F_in, F_out_p), lambda b, m: (0, 0)),     # weight^T (shared)
                pl.BlockSpec((1, F_out_p), lambda b, m: (0, 0)),        # bias (shared)
            ],
            out_specs=pl.BlockSpec((1, TM, F_out_p), lambda b, m: (b, m, 0)),
            scratch_shapes=[pltpu.VMEM((N_p, F_out_p), jnp.float32)],
        ),
        compiler_params=pltpu.CompilerParams(
            dimension_semantics=("parallel", "arbitrary"),
            vmem_limit_bytes=64 * 1024 * 1024,
        ),
        cost_estimate=pl.CostEstimate(
            flops=int(flops),
            transcendentals=0,
            bytes_accessed=int(bytes_accessed),
        ),
    )(adj_p, x_p, w_t, b_p)

    # Slice back to the logical shape.
    return out_p[:, :N, :F_out]


if __name__ == "__main__":
    # Small deterministic shapes consistent with the module's forward:
    #   input_: [B, N, F_in], adj: [B, N, N], Linear(F_in -> F_out)
    B, N, F_in, F_out = 2, 8, 32, 16

    key = jax.random.PRNGKey(0)
    k_x, k_adj, k_w, k_b = jax.random.split(key, 4)

    x = jax.random.normal(k_x, (B, N, F_in), dtype=jnp.float32)
    adj = jax.random.normal(k_adj, (B, N, N), dtype=jnp.float32)

    # Deterministic nn.Linear-style init (uniform in +/- 1/sqrt(F_in)).
    bound = 1.0 / (F_in ** 0.5)
    weight = jax.random.uniform(k_w, (F_out, F_in), jnp.float32, -bound, bound)
    bias = jax.random.uniform(k_b, (F_out,), jnp.float32, -bound, bound)

    out = gcn_forward(x, adj, weight, bias)
    out = jax.block_until_ready(out)

    # Pure-JAX reference (same math as torch.bmm + nn.Linear).
    ref = jnp.einsum("bnm,bmf->bnf", adj, x) @ weight.T + bias
    assert out.shape == (B, N, F_out)
    assert jnp.allclose(out, ref, atol=1e-4, rtol=1e-4)

    print("KERNEL_OK")
</pallas_src>

<mosaic_0001>
module attributes {stable_mosaic.version = 11 : i64} {
  func.func @gcn_kernel(%arg0: i32, %arg1: i32, %arg2: memref<1x8x8xf32, #tpu.memory_space<vmem>>, %arg3: memref<1x8x32xf32, #tpu.memory_space<vmem>>, %arg4: memref<32x128xf32, #tpu.memory_space<vmem>>, %arg5: memref<1x128xf32, #tpu.memory_space<vmem>>, %arg6: memref<1x8x128xf32, #tpu.memory_space<vmem>>, %arg7: memref<8x128xf32, #tpu.memory_space<vmem>>) attributes {dimension_semantics = [#tpu.dimension_semantics<parallel>, #tpu.dimension_semantics<arbitrary>], iteration_bounds = array<i64: 2, 1>, scalar_prefetch = 0 : i64, scratch_operands = 1 : i64, tpu.core_type = #tpu.core_type<tc>, window_params = [{transform_indices = @transform_0, window_bounds = array<i64: 1, 8, 8>}, {transform_indices = @transform_1, window_bounds = array<i64: 1, 8, 32>}, {pipeline_mode = #tpu.pipeline_mode<synchronous>, transform_indices = @transform_2, window_bounds = array<i64: 32, 128>}, {pipeline_mode = #tpu.pipeline_mode<synchronous>, transform_indices = @transform_3, window_bounds = array<i64: 1, 128>}, {transform_indices = @transform_4, window_bounds = array<i64: 1, 8, 128>}]} {
    %c0_i32 = arith.constant 0 : i32
    %0 = arith.cmpi eq, %arg1, %c0_i32 : i32
    %1 = arith.extui %0 : i1 to i32
    %c0_i32_0 = arith.constant 0 : i32
    %2 = arith.cmpi ne, %1, %c0_i32_0 : i32
    scf.if %2 {
      %c0_10 = arith.constant 0 : index
      %c0_11 = arith.constant 0 : index
      %c0_12 = arith.constant 0 : index
      %13 = vector.load %arg3[%c0_10, %c0_11, %c0_12] : memref<1x8x32xf32, #tpu.memory_space<vmem>>, vector<1x8x32xf32>
      %14 = vector.shape_cast %13 : vector<1x8x32xf32> to vector<8x32xf32>
      %c0_13 = arith.constant 0 : index
      %c0_14 = arith.constant 0 : index
      %15 = vector.load %arg4[%c0_13, %c0_14] : memref<32x128xf32, #tpu.memory_space<vmem>>, vector<32x128xf32>
      %cst_15 = arith.constant dense<0.000000e+00> : vector<8x128xf32>
      %16 = tpu.matmul %14, %15, %cst_15 {dimension_numbers = #tpu.dot_dimension_numbers<[1], [0], [0], [1], [0, 0, 1, 1], [], []>} : vector<8x32xf32>, vector<32x128xf32>, vector<8x128xf32> -> vector<8x128xf32>
      %c0_16 = arith.constant 0 : index
      %c0_17 = arith.constant 0 : index
      %17 = vector.load %arg7[%c0_16, %c0_17] : memref<8x128xf32, #tpu.memory_space<vmem>>, vector<8x128xf32>
      tpu.vector_store %arg7[%c0_16, %c0_17], %16 {strides = array<i32>} : memref<8x128xf32, #tpu.memory_space<vmem>>, vector<8x128xf32>,
    } else {
    }
    %c0 = arith.constant 0 : index
    %c0_1 = arith.constant 0 : index
    %c0_2 = arith.constant 0 : index
    %3 = vector.load %arg2[%c0, %c0_1, %c0_2] : memref<1x8x8xf32, #tpu.memory_space<vmem>>, vector<1x8x8xf32>
    %4 = vector.shape_cast %3 : vector<1x8x8xf32> to vector<8x8xf32>
    %c0_3 = arith.constant 0 : index
    %c0_4 = arith.constant 0 : index
    %5 = vector.load %arg7[%c0_3, %c0_4] : memref<8x128xf32, #tpu.memory_space<vmem>>, vector<8x128xf32>
    %cst = arith.constant dense<0.000000e+00> : vector<8x128xf32>
    %6 = tpu.matmul %4, %5, %cst {dimension_numbers = #tpu.dot_dimension_numbers<[1], [0], [0], [1], [0, 0, 1, 1], [], []>} : vector<8x8xf32>, vector<8x128xf32>, vector<8x128xf32> -> vector<8x128xf32>
    %c0_5 = arith.constant 0 : index
    %c0_6 = arith.constant 0 : index
    %7 = vector.load %arg5[%c0_5, %c0_6] : memref<1x128xf32, #tpu.memory_space<vmem>>, vector<1x128xf32>
    %8 = vector.broadcast %7 : vector<1x128xf32> to vector<8x128xf32>
    %9 = arith.addf %6, %8 : vector<8x128xf32>
    %c0_7 = arith.constant 0 : index
    %c0_8 = arith.constant 0 : index
    %c0_9 = arith.constant 0 : index
    %10 = vector.load %arg6[%c0_7, %c0_8, %c0_9] : memref<1x8x128xf32, #tpu.memory_space<vmem>>, vector<1x8x128xf32>
    %11 = vector.shape_cast %10 : vector<1x8x128xf32> to vector<8x128xf32>
    %12 = vector.shape_cast %9 : vector<8x128xf32> to vector<1x8x128xf32>
    tpu.vector_store %arg6[%c0_7, %c0_8, %c0_9], %12 {strides = array<i32>} : memref<1x8x128xf32, #tpu.memory_space<vmem>>, vector<1x8x128xf32>,
    return
  }
  func.func @transform_0(%arg0: i32, %arg1: i32) -> (i32, i32, i32) {
    %c0_i32 = arith.constant 0 : i32
    %c0_i32_0 = arith.constant 0 : i32
    return %arg0, %arg1, %c0_i32 : i32, i32, i32
  }
  func.func @transform_1(%arg0: i32, %arg1: i32) -> (i32, i32, i32) {
    %c0_i32 = arith.constant 0 : i32
    %c0_i32_0 = arith.constant 0 : i32
    %c0_i32_1 = arith.constant 0 : i32
    return %arg0, %c0_i32, %c0_i32_0 : i32, i32, i32
  }
  func.func @transform_2(%arg0: i32, %arg1: i32) -> (i32, i32) {
    %c0_i32 = arith.constant 0 : i32
    %c0_i32_0 = arith.constant 0 : i32
    %c0_i32_1 = arith.constant 0 : i32
    return %c0_i32, %c0_i32_0 : i32, i32
  }
  func.func @transform_3(%arg0: i32, %arg1: i32) -> (i32, i32) {
    %c0_i32 = arith.constant 0 : i32
    %c0_i32_0 = arith.constant 0 : i32
    %c0_i32_1 = arith.constant 0 : i32
    return %c0_i32, %c0_i32_0 : i32, i32
  }
  func.func @transform_4(%arg0: i32, %arg1: i32) -> (i32, i32, i32) {
    %c0_i32 = arith.constant 0 : i32
    %c0_i32_0 = arith.constant 0 : i32
    return %arg0, %arg1, %c0_i32 : i32, i32, i32
  }
}

</mosaic_0001>

<llo_original>
// kernel: tpu_custom_call.1
$region0: #{tpu_custom_call.1}
  #allocation0 [shape = 'u32[]', space=smem, size = 0x4, offset = 0x4, fixed_abs, tag = 'smem constant byte address 0x4 - core index']
  #allocation1 [shape = 'u32[144,128]{1,0:T(1,128)}', space=vmem, size = 0x12000, scoped, tag = 'internal scratch']
  #allocation2 [shape = 'f32[8,128]{1,0:T(8,128)}', space=vmem, size = 0x1000, scoped, tag = 'scratch operand']
  %s0 = inlined_call_operand.hbm [shape: f32[2,8,8], index: 0, kind: input, shape index: {}]
  %s1 = inlined_call_operand.hbm [shape: f32[2,8,32], index: 1, kind: input, shape index: {}]
  %s2 = inlined_call_operand.hbm [shape: f32[32,128], index: 2, kind: input, shape index: {}]
  %s3 = inlined_call_operand.vmem [shape: f32[1,128], index: 3, kind: input, shape index: {}]
  %s4 = inlined_call_operand.hbm [shape: f32[2,8,128], index: 4, kind: output, shape index: {}]
  %s5 = sld [smem:[#allocation0]]
  $region65: #{tpu_custom_call.1} parent=0
    _
  %s7 = ssub.s32 1, %s5
  %s8 = scalar_select 0, %s7, %s5
  $region1: #{tpu_custom_call.1} parent=0
    #allocation3 [shape = 'u8[8192]{0}', space=vmem, size = 0x2000, scoped, tag = 'input window, operand 0']
    #allocation4 [shape = 's32[2]{0}', space=sflag, size = 0x8, scoped, tag = 'scoped memory for tpu_custom_call.1']
    #allocation5 [shape = 's32[2]{0}', space=sflag, size = 0x8, scoped, tag = 'scoped memory for tpu_custom_call.1']
    #allocation6 [shape = 'u8[8192]{0}', space=vmem, size = 0x2000, scoped, tag = 'input window, operand 1']
    #allocation7 [shape = 's32[2]{0}', space=sflag, size = 0x8, scoped, tag = 'scoped memory for tpu_custom_call.1']
    #allocation8 [shape = 'u8[16384]{0}', space=vmem, size = 0x4000, scoped, tag = 'input window, operand 2, single buffered']
    #allocation9 [shape = 'u8[8192]{0}', space=vmem, size = 0x2000, scoped, tag = 'output window, operand 0']
    %9 = vsyncpa [#allocation4], 0
    %s10 = scalar_lea.sflag [#allocation4], 1
    %11 = vsyncpa %s10, 0
    %12 = vsyncpa [#allocation7], 0
    %s13 = scalar_lea.sflag [#allocation7], 1
    %14 = vsyncpa %s13, 0
    %15 = vsyncpa [#allocation5], 0
    %s16 = scalar_lea.sflag [#allocation5], 1
    %17 = vsyncpa %s16, 0
    loop: start=0, step=1, limit=4
    $region2: #{tpu_custom_call.1} parent=1 // loop_pre_header
      _
    $region3: #{tpu_custom_call.1} parent=1 // loop_header
      %s19 = sphi 0, %s23
      %p20 = scmp.ge.s32.totalorder %s19, 4
      %s26 = sphi 0, %s38
      %s27 = sphi 0, %s34
      %s28 = sphi 0, %s26
      %s29 = sphi 0, %s27
      %s30 = sphi 0, %s28
      %s31 = sphi 0, %s29
      %s43 = sphi 0, %s45
      %s46 = sphi 0, %s43
      %s47 = sphi 0, %s46
      %s63 = sphi 0, %s47
      %s69 = sphi 0, %s71
      %s72 = sphi 0, %s69
      %s73 = sphi 0, %s72
      %s89 = sphi 0, %s73
      %s93 = sphi 0, %s93
      %s95 = sphi 0, %s93
      %s96 = sphi 0, %s95
      %s110 = sphi 0, %s96
      %s114 = sphi 0, %s114
      %s116 = sphi 0, %s114
      %s117 = sphi 0, %s116
      %s131 = sphi 0, %s117
      %s139 = sphi 0, %s141
      %s142 = sphi 0, %s139
      %s143 = sphi 0, %s142
      %s159 = sphi 0, %s143
    $region4: #{tpu_custom_call.1} parent=1 // loop_header_branch
      %22 = sbr.rel (%p20) target = $region8
    $region5: #{tpu_custom_call.1} parent=1 // loop_body
      %s24 = ssub.s32 %s19, 1
      %s25 = ssub.s32 %s19, 2
      %s32 = sadd.s32 1, %s27
      %p33 = scmp.ge.s32.totalorder %s32, 1
      %s34 = scalar_select %p33, 0, %s32
      %s35 = sadd.s32 1, %s26
      %s36 = scalar_select %p33, %s35, %s26
      %p37 = scmp.ge.s32.totalorder %s36, 2
      %s38 = scalar_select %p37, 0, %s36
      %s39 = ssub.s32 %s26, %s38
      %s40 = ssub.s32 %s27, %s34
      %s41 = sor.u32 %s39, %s40
      %p42 = scmp.eq.s32.totalorder %s41, 0
      %s44 = sadd.s32 %s43, 1
      %s45 = scalar_select %p42, %s43, %s44
      %p48 = pneg %p42
      %p49 = scmp.eq.s32.totalorder %s19, 1
      %p50 = por %p48, %p49
      %p51 = scmp.ne.s32.totalorder %s43, %s46
      %p52 = scmp.eq.s32.totalorder %s19, 0
      %p53 = por %p51, %p52
      %p54 = scmp.ne.s32.totalorder %s43, %s46
      %p55 = scmp.eq.s32.totalorder %s24, 1
      %p56 = por %p54, %p55
      %p57 = scmp.ne.s32.totalorder %s46, %s47
      %p58 = scmp.eq.s32.totalorder %s24, 0
      %p59 = por %p57, %p58
      %p60 = scmp.ne.s32.totalorder %s46, %s47
      %p61 = scmp.eq.s32.totalorder %s25, 1
      %p62 = por %p60, %p61
      %p64 = scmp.ne.s32.totalorder %s47, %s63
      %p65 = scmp.eq.s32.totalorder %s25, 0
      %p66 = por %p64, %p65
      %s67 = ssub.s32 %s26, %s38
      %p68 = scmp.eq.s32.totalorder %s67, 0
      %s70 = sadd.s32 %s69, 1
      %s71 = scalar_select %p68, %s69, %s70
      %p74 = pneg %p68
      %p75 = scmp.eq.s32.totalorder %s19, 1
      %p76 = por %p74, %p75
      %p77 = scmp.ne.s32.totalorder %s69, %s72
      %p78 = scmp.eq.s32.totalorder %s19, 0
      %p79 = por %p77, %p78
      %p80 = scmp.ne.s32.totalorder %s69, %s72
      %p81 = scmp.eq.s32.totalorder %s24, 1
      %p82 = por %p80, %p81
      %p83 = scmp.ne.s32.totalorder %s72, %s73
      %p84 = scmp.eq.s32.totalorder %s24, 0
      %p85 = por %p83, %p84
      %p86 = scmp.ne.s32.totalorder %s72, %s73
      %p87 = scmp.eq.s32.totalorder %s25, 1
      %p88 = por %p86, %p87
      %p90 = scmp.ne.s32.totalorder %s73, %s89
      %p91 = scmp.eq.s32.totalorder %s25, 0
      %p92 = por %p90, %p91
      %s94 = sadd.s32 %s93, 1
      %p97 = scmp.eq.s32.totalorder %s19, 1
      %p98 = scmp.ne.s32.totalorder %s93, %s95
      %p99 = scmp.eq.s32.totalorder %s19, 0
      %p100 = por %p98, %p99
      %p101 = scmp.ne.s32.totalorder %s93, %s95
      %p102 = scmp.eq.s32.totalorder %s24, 1
      %p103 = por %p101, %p102
      %p104 = scmp.ne.s32.totalorder %s95, %s96
      %p105 = scmp.eq.s32.totalorder %s24, 0
      %p106 = por %p104, %p105
      %p107 = scmp.ne.s32.totalorder %s95, %s96
      %p108 = scmp.eq.s32.totalorder %s25, 1
      %p109 = por %p107, %p108
      %p111 = scmp.ne.s32.totalorder %s96, %s110
      %p112 = scmp.eq.s32.totalorder %s25, 0
      %p113 = por %p111, %p112
      %s115 = sadd.s32 %s114, 1
      %p118 = scmp.eq.s32.totalorder %s19, 1
      %p119 = scmp.ne.s32.totalorder %s114, %s116
      %p120 = scmp.eq.s32.totalorder %s19, 0
      %p121 = por %p119, %p120
      %p122 = scmp.ne.s32.totalorder %s114, %s116
      %p123 = scmp.eq.s32.totalorder %s24, 1
      %p124 = por %p122, %p123
      %p125 = scmp.ne.s32.totalorder %s116, %s117
      %p126 = scmp.eq.s32.totalorder %s24, 0
      %p127 = por %p125, %p126
      %p128 = scmp.ne.s32.totalorder %s116, %s117
      %p129 = scmp.eq.s32.totalorder %s25, 1
      %p130 = por %p128, %p129
      %p132 = scmp.ne.s32.totalorder %s117, %s131
      %p133 = scmp.eq.s32.totalorder %s25, 0
      %p134 = por %p132, %p133
      %s135 = ssub.s32 %s26, %s38
      %s136 = ssub.s32 %s27, %s34
      %s137 = sor.u32 %s135, %s136
      %p138 = scmp.eq.s32.totalorder %s137, 0
      %s140 = sadd.s32 %s139, 1
      %s141 = scalar_select %p138, %s139, %s140
      %p144 = pneg %p138
      %p145 = scmp.eq.s32.totalorder %s19, 1
      %p146 = por %p144, %p145
      %p147 = scmp.ne.s32.totalorder %s139, %s142
      %p148 = scmp.eq.s32.totalorder %s19, 0
      %p149 = por %p147, %p148
      %p150 = scmp.ne.s32.totalorder %s139, %s142
      %p151 = scmp.eq.s32.totalorder %s24, 1
      %p152 = por %p150, %p151
      %p153 = scmp.ne.s32.totalorder %s142, %s143
      %p154 = scmp.eq.s32.totalorder %s24, 0
      %p155 = por %p153, %p154
      %p156 = scmp.ne.s32.totalorder %s142, %s143
      %p157 = scmp.eq.s32.totalorder %s25, 1
      %p158 = por %p156, %p157
      %p160 = scmp.ne.s32.totalorder %s143, %s159
      %p161 = scmp.eq.s32.totalorder %s25, 0
      %p162 = por %p160, %p161
      %p163 = scmp.le.s32.totalorder 1, %s19
      %p164 = scmp.lt.s32.totalorder %s19, 3
      %p165 = pnand %p163, %p164
      %p166 = pneg %p165
      // Predicated region
      $region9: #{tpu_custom_call.1} parent=5 // pred_check
        _
      $region10: #{tpu_custom_call.1} parent=5 // pred_check_branch
        %168 = sbr.rel (%p165) target = $region12
      $region11: #{tpu_custom_call.1} parent=5 // pred_region
        %s169 = ssub.s32 %s19, 1
        // Predicated region
        $region13: #{tpu_custom_call.1} parent=11 // pred_check
          %p170 = pneg %p106
        $region14: #{tpu_custom_call.1} parent=11 // pred_check_branch
          %172 = sbr.rel (%p170) target = $region16
        $region15: #{tpu_custom_call.1} parent=11 // pred_region
          %s174 = ssub.s32 512, 512
          %175 = vsyncadd [#allocation7], %s174
          %s176 = sshll.u32 [#allocation8], 4
          %s177 = int_to_ptr.vmem [resolvable:$true] %s176
          %182 = dma.hbm_to_vmem [thread:$0]  %s2, 512, %s177, [#allocation7], 128, 128, 8
        $region16: #{tpu_custom_call.1} parent=11 // pred_fallthru
          _
        // Predicated region
        $region17: #{tpu_custom_call.1} parent=11 // pred_check
          %p183 = pneg %p127
        $region18: #{tpu_custom_call.1} parent=11 // pred_check_branch
          %185 = sbr.rel (%p183) target = $region20
        $region19: #{tpu_custom_call.1} parent=11 // pred_region
          _
        $region20: #{tpu_custom_call.1} parent=11 // pred_fallthru
          _
      $region12: #{tpu_custom_call.1} parent=5 // pred_fallthru
        _
      %p186 = scmp.lt.s32.totalorder %s19, 2
      // Predicated region
      $region21: #{tpu_custom_call.1} parent=5 // pred_check
        %p187 = pneg %p186
      $region22: #{tpu_custom_call.1} parent=5 // pred_check_branch
        %189 = sbr.rel (%p187) target = $region24
      $region23: #{tpu_custom_call.1} parent=5 // pred_region
        // Predicated region
        $region25: #{tpu_custom_call.1} parent=23 // pred_check
          %p190 = pneg %p53
        $region26: #{tpu_custom_call.1} parent=23 // pred_check_branch
          %192 = sbr.rel (%p190) target = $region28
        $region27: #{tpu_custom_call.1} parent=23 // pred_region
          %s193 = sand.u32 %s43, 1
          %s194 = scalar_lea.sflag [#allocation4], %s193
          %s195 = sand.u32 %s43, 1
          %s196 = smul.addr %s195, 8
          %s197 = scalar_lea.vmem [#allocation3], %s196
          %s199 = ssub.s32 128, 128
          %200 = vsyncadd %s194, %s199
          %s201 = sadd.s32 %s27, %s26
          %s202 = smul.addr %s201, 128
          %s203 = scalar_lea.hbm %s0, %s202
          %s205 = sshll.u32 %s197, 4
          %s206 = int_to_ptr.vmem [resolvable:$true] %s205
          %208 = dma.hbm_to_vmem [thread:$0]  %s203, 128, %s206, %s194
        $region28: #{tpu_custom_call.1} parent=23 // pred_fallthru
          _
        // Predicated region
        $region29: #{tpu_custom_call.1} parent=23 // pred_check
          %p209 = pneg %p79
        $region30: #{tpu_custom_call.1} parent=23 // pred_check_branch
          %211 = sbr.rel (%p209) target = $region32
        $region31: #{tpu_custom_call.1} parent=23 // pred_region
          %s212 = sand.u32 %s19, 1
          %s213 = scalar_lea.sflag [#allocation7], %s212
          %s214 = sand.u32 %s69, 1
          %s215 = smul.addr %s214, 8
          %s216 = scalar_lea.vmem [#allocation6], %s215
          %s218 = ssub.s32 128, 128
          %219 = vsyncadd %s213, %s218
          %s220 = smul.addr %s26, 128
          %s221 = scalar_lea.hbm %s1, %s220
          %s223 = sshll.u32 %s216, 4
          %s224 = int_to_ptr.vmem [resolvable:$true] %s223
          %226 = dma.hbm_to_vmem [thread:$0]  %s221, 128, %s224, %s213
        $region32: #{tpu_custom_call.1} parent=23 // pred_fallthru
          _
      $region24: #{tpu_custom_call.1} parent=5 // pred_fallthru
        _
      %p227 = scmp.le.s32.totalorder 1, %s19
      %p228 = scmp.lt.s32.totalorder %s19, 3
      %p229 = pnand %p227, %p228
      %p230 = pneg %p229
      // Predicated region
      $region33: #{tpu_custom_call.1} parent=5 // pred_check
        _
      $region34: #{tpu_custom_call.1} parent=5 // pred_check_branch
        %232 = sbr.rel (%p229) target = $region36
      $region35: #{tpu_custom_call.1} parent=5 // pred_region
        %s233 = ssub.s32 %s19, 1
        %s234 = sand.u32 %s46, 1
        %s235 = scalar_lea.sflag [#allocation4], %s234
        %s236 = sand.u32 %s46, 1
        %s237 = smul.addr %s236, 8
        %s238 = scalar_lea.vmem [#allocation3], %s237
        // Predicated region
        $region37: #{tpu_custom_call.1} parent=35 // pred_check
          %p239 = pneg %p59
        $region38: #{tpu_custom_call.1} parent=35 // pred_check_branch
          %241 = sbr.rel (%p239) target = $region40
        $region39: #{tpu_custom_call.1} parent=35 // pred_region
          %242 = dma.done %s235, 128
        $region40: #{tpu_custom_call.1} parent=35 // pred_fallthru
          _
        %s243 = sand.u32 %s24, 1
        %s244 = scalar_lea.sflag [#allocation7], %s243
        %s245 = sand.u32 %s72, 1
        %s246 = smul.addr %s245, 8
        %s247 = scalar_lea.vmem [#allocation6], %s246
        // Predicated region
        $region41: #{tpu_custom_call.1} parent=35 // pred_check
          %p248 = pneg %p85
        $region42: #{tpu_custom_call.1} parent=35 // pred_check_branch
          %250 = sbr.rel (%p248) target = $region44
        $region43: #{tpu_custom_call.1} parent=35 // pred_region
          %251 = dma.done %s244, 128
        $region44: #{tpu_custom_call.1} parent=35 // pred_fallthru
          _
        // Predicated region
        $region45: #{tpu_custom_call.1} parent=35 // pred_check
          %p252 = pneg %p106
        $region46: #{tpu_custom_call.1} parent=35 // pred_check_branch
          %254 = sbr.rel (%p252) target = $region48
        $region47: #{tpu_custom_call.1} parent=35 // pred_region
          %255 = dma.done [#allocation7], 512
        $region48: #{tpu_custom_call.1} parent=35 // pred_fallthru
          _
        %s256 = sand.u32 %s46, 1
        %s257 = scalar_lea.sflag [#allocation4], %s256
        %s258 = sand.u32 %s46, 1
        %s259 = smul.addr %s258, 8
        %s260 = scalar_lea.vmem [#allocation3], %s259
        %p261 = pneg %p59
        %p262 = pneg %p56
        %s263 = sand.u32 %s24, 1
        %s264 = scalar_lea.sflag [#allocation7], %s263
        %s265 = sand.u32 %s72, 1
        %s266 = smul.addr %s265, 8
        %s267 = scalar_lea.vmem [#allocation6], %s266
        %p268 = pneg %p85
        %p269 = pneg %p82
        %p270 = pneg %p106
        %p271 = pneg %p103
        %p272 = pneg %p127
        %p273 = pneg %p124
        %p274 = pneg %p155
        %p275 = pneg %p152
        %s276 = sand.u32 %s142, 1
        %s277 = scalar_lea.sflag [#allocation5], %s276
        %s278 = sand.u32 %s142, 1
        %s279 = smul.addr %s278, 8
        %s280 = scalar_lea.vmem [#allocation9], %s279
        %p281 = scmp.eq.s32.totalorder %s29, 0
        // Predicated region
        $region49: #{tpu_custom_call.1} parent=35 // pred_check
          %p282 = pneg %p281
        $region50: #{tpu_custom_call.1} parent=35 // pred_check_branch
          %284 = sbr.rel (%p282) target = $region52
        $region51: #{tpu_custom_call.1} parent=35 // pred_region
          %v285 = vld [vmem:[%s247] sm:$0xff]
          %v286 = vld [vmem:[#allocation8] sm:$0xff]
          %v287 = vld [vmem:[#allocation8 + $0x8] sm:$0xff]
          %v288 = vld [vmem:[#allocation8 + $0x10] sm:$0xff]
          %v289 = vld [vmem:[#allocation8 + $0x18] sm:$0xff]
          %vm290 = vcmask 261120
          %v292 = vsel %vm290, %v285, 0
          %294 = vmatprep.subr.mxu0 0.0
          %295 = vmatpush1.msra.mxu0 0.0
          %296 = vmatprep.subr.mxu0 0.0
          %297 = vmatpush1.msra.mxu0 0.0
          %298 = vmatprep.subr.mxu0 0.0
          %299 = vmatpush1.msra.mxu0 0.0
          %300 = vmatprep.subr.mxu0 0.0
          %301 = vmatpush1.msra.mxu0 0.0
          %302 = vmatprep.subr.mxu0 0.0
          %303 = vmatpush1.msra.mxu0 0.0
          %304 = vmatprep.subr.mxu0 0.0
          %305 = vmatpush1.msra.mxu0 0.0
          %306 = vmatprep.subr.mxu0 0.0
          %307 = vmatpush1.msra.mxu0 0.0
          %308 = vmatprep.subr.mxu0 0.0
          %309 = vmatpush1.msra.mxu0 0.0
          %310 = vmatprep.subr.mxu0 0.0
          %311 = vmatpush1.msra.mxu0 0.0
          %312 = vmatprep.subr.mxu0 0.0
          %313 = vmatpush1.msra.mxu0 0.0
          %314 = vmatprep.subr.mxu0 0.0
          %315 = vmatpush1.msra.mxu0 0.0
          %316 = vmatprep.subr.mxu0 0.0
          %317 = vmatpush1.msra.mxu0 0.0
          %318 = vmatprep.subr.mxu0 0.0
          %319 = vmatpush1.msra.mxu0 %v289
          %320 = vmatprep.subr.mxu0 0.0
          %321 = vmatpush1.msra.mxu0 %v288
          %322 = vmatprep.subr.mxu0 0.0
          %323 = vmatpush1.msra.mxu0 %v287
          %324 = vmatprep.subr.mxu0 0.0
          %325 = vmatpush1.msra.mxu0 %v286
          %326 = vmatprep.subr.mxu0 0.0
          %327 = vmatpush2.msra.mxu0 0.0
          %328 = vmatprep.subr.mxu0 0.0
          %329 = vmatpush2.msra.mxu0 0.0
          %330 = vmatprep.subr.mxu0 0.0
          %331 = vmatpush2.msra.mxu0 0.0
          %332 = vmatprep.subr.mxu0 0.0
          %333 = vmatpush2.msra.mxu0 0.0
          %334 = vmatprep.subr.mxu0 0.0
          %335 = vmatpush2.msra.mxu0 0.0
          %336 = vmatprep.subr.mxu0 0.0
          %337 = vmatpush2.msra.mxu0 0.0
          %338 = vmatprep.subr.mxu0 0.0
          %339 = vmatpush2.msra.mxu0 0.0
          %340 = vmatprep.subr.mxu0 0.0
          %341 = vmatpush2.msra.mxu0 0.0
          %342 = vmatprep.subr.mxu0 0.0
          %343 = vmatpush2.msra.mxu0 0.0
          %344 = vmatprep.subr.mxu0 0.0
          %345 = vmatpush2.msra.mxu0 0.0
          %346 = vmatprep.subr.mxu0 0.0
          %347 = vmatpush2.msra.mxu0 0.0
          %348 = vmatprep.subr.mxu0 0.0
          %349 = vmatpush2.msra.mxu0 0.0
          %350 = vmatprep.subr.mxu0 0.0
          %351 = vmatpush2.msra.mxu0 0.0
          %352 = vmatprep.subr.mxu0 0.0
          %353 = vmatpush2.msra.mxu0 0.0
          %354 = vmatprep.subr.mxu0 0.0
          %355 = vmatpush2.msra.mxu0 0.0
          %356 = vmatprep.subr.mxu0 0.0
          %357 = vmatpush2.msra.mxu0 0.0
          %358 = vmatprep.mubr.f32.mxu0 0.0
          %359 = vmatmul.mubr.f32.gmra.mxu0 %v292
          %v360 = vpop.f32.mrf.mxu0
          %v361 = vadd.f32 0.0, %v360
          %v362 = vpop.f32.mrf.mxu0
          %363 = vdwg.mxu0
          %364 = vst [vmem:[#allocation2] sm:$0xff] %v361
        $region52: #{tpu_custom_call.1} parent=35 // pred_fallthru
          _
        %v365 = vld [vmem:[%s238] sm:$0xff]
        %v366 = vld [vmem:[#allocation2] sm:$0xff]
        %v367 = vld [vmem:[%s3] sm:$0x1]
        %v369 = vlaneseq
        %v370 = vshrl.u32 %v369, 7
        %v371 = vsub.s32 0, %v370
        %v372 = vrot.slane %v367, %v371
        %vm374 = vcmask 64512
        %v376 = vsel %vm374, %v365, 0
        %378 = vmatprep.subr.mxu0 0.0
        %379 = vmatpush1.msra.mxu0 0.0
        %380 = vmatprep.subr.mxu0 0.0
        %381 = vmatpush1.msra.mxu0 0.0
        %382 = vmatprep.subr.mxu0 0.0
        %383 = vmatpush1.msra.mxu0 0.0
        %384 = vmatprep.subr.mxu0 0.0
        %385 = vmatpush1.msra.mxu0 0.0
        %386 = vmatprep.subr.mxu0 0.0
        %387 = vmatpush1.msra.mxu0 0.0
        %388 = vmatprep.subr.mxu0 0.0
        %389 = vmatpush1.msra.mxu0 0.0
        %390 = vmatprep.subr.mxu0 0.0
        %391 = vmatpush1.msra.mxu0 0.0
        %392 = vmatprep.subr.mxu0 0.0
        %393 = vmatpush1.msra.mxu0 0.0
        %394 = vmatprep.subr.mxu0 0.0
        %395 = vmatpush1.msra.mxu0 0.0
        %396 = vmatprep.subr.mxu0 0.0
        %397 = vmatpush1.msra.mxu0 0.0
        %398 = vmatprep.subr.mxu0 0.0
        %399 = vmatpush1.msra.mxu0 0.0
        %400 = vmatprep.subr.mxu0 0.0
        %401 = vmatpush1.msra.mxu0 0.0
        %402 = vmatprep.subr.mxu0 0.0
        %403 = vmatpush1.msra.mxu0 0.0
        %404 = vmatprep.subr.mxu0 0.0
        %405 = vmatpush1.msra.mxu0 0.0
        %406 = vmatprep.subr.mxu0 0.0
        %407 = vmatpush1.msra.mxu0 0.0
        %408 = vmatprep.subr.mxu0 0.0
        %409 = vmatpush1.msra.mxu0 %v366
        %410 = vmatprep.subr.mxu0 0.0
        %411 = vmatpush2.msra.mxu0 0.0
        %412 = vmatprep.subr.mxu0 0.0
        %413 = vmatpush2.msra.mxu0 0.0
        %414 = vmatprep.subr.mxu0 0.0
        %415 = vmatpush2.msra.mxu0 0.0
        %416 = vmatprep.subr.mxu0 0.0
        %417 = vmatpush2.msra.mxu0 0.0
        %418 = vmatprep.subr.mxu0 0.0
        %419 = vmatpush2.msra.mxu0 0.0
        %420 = vmatprep.subr.mxu0 0.0
        %421 = vmatpush2.msra.mxu0 0.0
        %422 = vmatprep.subr.mxu0 0.0
        %423 = vmatpush2.msra.mxu0 0.0
        %424 = vmatprep.subr.mxu0 0.0
        %425 = vmatpush2.msra.mxu0 0.0
        %426 = vmatprep.subr.mxu0 0.0
        %427 = vmatpush2.msra.mxu0 0.0
        %428 = vmatprep.subr.mxu0 0.0
        %429 = vmatpush2.msra.mxu0 0.0
        %430 = vmatprep.subr.mxu0 0.0
        %431 = vmatpush2.msra.mxu0 0.0
        %432 = vmatprep.subr.mxu0 0.0
        %433 = vmatpush2.msra.mxu0 0.0
        %434 = vmatprep.subr.mxu0 0.0
        %435 = vmatpush2.msra.mxu0 0.0
        %436 = vmatprep.subr.mxu0 0.0
        %437 = vmatpush2.msra.mxu0 0.0
        %438 = vmatprep.subr.mxu0 0.0
        %439 = vmatpush2.msra.mxu0 0.0
        %440 = vmatprep.subr.mxu0 0.0
        %441 = vmatpush2.msra.mxu0 0.0
        %442 = vmatprep.mubr.f32.mxu0 0.0
        %443 = vmatmul.mubr.f32.gmra.mxu0 %v376
        %v444 = vpop.f32.mrf.mxu0
        %v445 = vadd.f32 %v372, %v444
        %v446 = vpop.f32.mrf.mxu0
        %447 = vdwg.mxu0
        %448 = vst [vmem:[%s280] sm:$0xff] %v445
        %s449 = sand.u32 %s142, 1
        %s450 = scalar_lea.sflag [#allocation5], %s449
        %s451 = sand.u32 %s142, 1
        %s452 = smul.addr %s451, 8
        %s453 = scalar_lea.vmem [#allocation9], %s452
        // Predicated region
        $region53: #{tpu_custom_call.1} parent=35 // pred_check
          %p454 = pneg %p152
        $region54: #{tpu_custom_call.1} parent=35 // pred_check_branch
          %456 = sbr.rel (%p454) target = $region56
        $region55: #{tpu_custom_call.1} parent=35 // pred_region
          %s458 = ssub.s32 128, 128
          %459 = vsyncadd %s450, %s458
          %s460 = sadd.s32 %s29, %s28
          %s461 = smul.addr %s460, 128
          %s462 = scalar_lea.hbm %s4, %s461
          %s464 = sshll.u32 %s453, 4
          %s465 = int_to_ptr.vmem [resolvable:$true] %s464
          %467 = dma.vmem_to_hbm [thread:$0]  %s465, 128, %s462, %s450
        $region56: #{tpu_custom_call.1} parent=35 // pred_fallthru
          _
      $region36: #{tpu_custom_call.1} parent=5 // pred_fallthru
        _
      %p468 = scmp.le.s32.totalorder 2, %s19
      // Predicated region
      $region57: #{tpu_custom_call.1} parent=5 // pred_check
        %p469 = pneg %p468
      $region58: #{tpu_custom_call.1} parent=5 // pred_check_branch
        %471 = sbr.rel (%p469) target = $region60
      $region59: #{tpu_custom_call.1} parent=5 // pred_region
        %s472 = ssub.s32 %s19, 2
        // Predicated region
        $region61: #{tpu_custom_call.1} parent=59 // pred_check
          %p473 = pneg %p158
        $region62: #{tpu_custom_call.1} parent=59 // pred_check_branch
          %475 = sbr.rel (%p473) target = $region64
        $region63: #{tpu_custom_call.1} parent=59 // pred_region
          %s476 = sand.u32 %s143, 1
          %s477 = scalar_lea.sflag [#allocation5], %s476
          %s478 = sand.u32 %s143, 1
          %s479 = smul.addr %s478, 8
          %s480 = scalar_lea.vmem [#allocation9], %s479
          %481 = dma.done %s477, 128
        $region64: #{tpu_custom_call.1} parent=59 // pred_fallthru
          _
      $region60: #{tpu_custom_call.1} parent=5 // pred_fallthru
        _
    $region6: #{tpu_custom_call.1} parent=1 // loop_footer
      %s23 = sadd.s32 1, %s19
    $region7: #{tpu_custom_call.1} parent=1 // loop_footer_branch
      %18 = sbr.rel target = $region3
    $region8: #{tpu_custom_call.1} parent=1 // loop_exit
      _
    %482 = vsyncpa [#allocation4], 1
    %s483 = scalar_lea.sflag [#allocation4], 1
    %484 = vsyncpa %s483, 1
    %485 = vsyncpa [#allocation7], 1
    %s486 = scalar_lea.sflag [#allocation7], 1
    %487 = vsyncpa %s486, 1
    %488 = vsyncpa [#allocation5], 1
    %s489 = scalar_lea.sflag [#allocation5], 1
    %490 = vsyncpa %s489, 1

</llo_original>
